<compile_context>
chip_gen: v7x
topology: tpu7x:2x2x1
jax: 0.10.0
libtpu: 0.0.40
codegen_flags: <defaults>
</compile_context>

<pallas_src>
from functools import partial

import jax
import jax.numpy as jnp
from jax.experimental import pallas as pl
from jax.experimental.pallas import tpu as pltpu


def primary_caps_kernel(p_ref, w_ref, b_ref, o_ref, acc_ref, *,
                        num_capsules, out_channels):
    # p_ref:   (tk, tn)              patches tile (K x lanes)
    # w_ref:   (num_caps*OC, tk)     fused capsule weights tile
    # b_ref:   (num_caps*OC, 1)      fused bias column
    # o_ref:   (num_caps, OC, tn)    squashed output tile (lane-dense last dim)
    # acc_ref: (num_caps*OC, tn) f32 accumulator over the K grid axis
    kb = pl.program_id(1)

    @pl.when(kb == 0)
    def _init():
        acc_ref[...] = jnp.zeros_like(acc_ref)

    # Single fused MXU matmul for all capsules.
    acc_ref[...] += jnp.dot(w_ref[...], p_ref[...],
                            preferred_element_type=jnp.float32)

    @pl.when(kb == pl.num_programs(1) - 1)
    def _finalize():
        u = acc_ref[...] + b_ref[...]                 # (NCO, tn), f32, 1 bcast add
        tn = u.shape[-1]
        u3 = u.reshape(num_capsules, out_channels, tn)
        # squash over the capsule axis (== PyTorch dim=-1 after the cat):
        #   out = u * sqrt(|u|^2) / (1 + |u|^2)
        sq = jnp.sum(u3 * u3, axis=0, keepdims=True)  # (1, OC, tn)
        factor = jnp.sqrt(sq) * pl.reciprocal(1.0 + sq, approx=True)
        o_ref[...] = (u3 * factor).astype(o_ref.dtype)


def im2col_nchw(x, kernel_size, stride):
    """x: (B, C, H, W) -> patches (B, C*k*k, Ho*Wo), plus (Ho, Wo)."""
    B, C, H, W = x.shape
    Ho = (H - kernel_size) // stride + 1
    Wo = (W - kernel_size) // stride + 1
    cols = []
    for kh in range(kernel_size):
        for kw in range(kernel_size):
            cols.append(
                x[:, :, kh:kh + stride * Ho:stride, kw:kw + stride * Wo:stride]
            )  # (B, C, Ho, Wo)
    patches = jnp.stack(cols, axis=2)                 # (B, C, k*k, Ho, Wo)
    patches = patches.reshape(B, C * kernel_size * kernel_size, Ho * Wo)
    return patches, Ho, Wo


def _round_up(x, m):
    return ((x + m - 1) // m) * m


def primary_caps_forward(x, weights, bias, *, kernel_size, stride,
                         out_channels, n_pix,
                         compute_dtype=jnp.bfloat16):
    """weights: (num_caps, OC, C_in, k, k), bias: (num_caps, OC).

    Returns (B, OC*n_pix, num_caps), matching the PyTorch module output.
    """
    B = x.shape[0]
    num_caps = weights.shape[0]
    nco = num_caps * out_channels

    patches, Ho, Wo = im2col_nchw(x, kernel_size, stride)
    assert Ho * Wo == n_pix, (Ho, Wo, n_pix)
    K = patches.shape[1]
    Np = B * n_pix                                     # batch folded onto lanes

    # Tile sizes / zero padding so every tile is (8,128)-aligned and lane-dense.
    # Tiles as large as safely fit (per-grid-step overhead ~0.35us).
    tk = min(1024, _round_up(K, 128))
    K_pad = _round_up(K, tk)
    tn = min(1024, _round_up(Np, 128))
    Np_pad = _round_up(Np, tn)

    # (B, K, n_pix) -> (K, B*n_pix), pad, cast MXU inputs to compute dtype.
    p2 = jnp.transpose(patches, (1, 0, 2)).reshape(K, Np)
    p2 = jnp.pad(p2, ((0, K_pad - K), (0, Np_pad - Np))).astype(compute_dtype)

    w_all = weights.reshape(nco, K)
    w_all = jnp.pad(w_all, ((0, 0), (0, K_pad - K))).astype(compute_dtype)
    b_col = bias.reshape(nco, 1).astype(jnp.float32)   # bias added post-MXU in f32

    grid = (Np_pad // tn, K_pad // tk)                 # reduction axis (K) last

    elt = jnp.dtype(compute_dtype).itemsize
    cost = pl.CostEstimate(
        flops=2 * nco * K_pad * Np_pad,
        transcendentals=2 * out_channels * Np_pad,     # sqrt + recip per (OC, lane)
        bytes_accessed=(K_pad * Np_pad * elt           # patches
                        + nco * K_pad * elt            # weights
                        + nco * 4                      # bias
                        + nco * Np_pad * 4),           # f32 output
    )

    out = pl.pallas_call(
        partial(primary_caps_kernel,
                num_capsules=num_caps, out_channels=out_channels),
        out_shape=jax.ShapeDtypeStruct((num_caps, out_channels, Np_pad),
                                       jnp.float32),
        grid_spec=pltpu.PrefetchScalarGridSpec(
            num_scalar_prefetch=0,
            grid=grid,
            in_specs=[
                pl.BlockSpec((tk, tn), lambda j, k: (k, j)),       # patches
                pl.BlockSpec((nco, tk), lambda j, k: (0, k)),      # fused weights
                pl.BlockSpec((nco, 1), lambda j, k: (0, 0)),       # fused bias
            ],
            out_specs=pl.BlockSpec((num_caps, out_channels, tn),
                                   lambda j, k: (0, 0, j)),
            scratch_shapes=[pltpu.VMEM((nco, tn), jnp.float32)],
        ),
        compiler_params=pltpu.CompilerParams(
            dimension_semantics=("parallel", "arbitrary")),
        cost_estimate=cost,
    )(p2, w_all, b_col)

    # Layout glue back to PyTorch: (num_caps, OC, B*n_pix) -> (B, OC*n_pix, num_caps)
    out = out[:, :, :Np].reshape(num_caps, out_channels, B, n_pix)
    out = jnp.transpose(out, (2, 1, 3, 0)).reshape(B, out_channels * n_pix,
                                                   num_caps)
    return out


def primary_caps_reference(x, weights, bias, *, stride, out_channels, n_pix):
    """Pure-JAX reference mirroring the PyTorch forward."""
    B = x.shape[0]
    num_caps = weights.shape[0]
    u = []
    for c in range(num_caps):
        conv = jax.lax.conv_general_dilated(
            x, weights[c], window_strides=(stride, stride), padding="VALID",
            dimension_numbers=("NCHW", "OIHW", "NCHW"),
        ) + bias[c][None, :, None, None]
        u.append(conv.reshape(B, out_channels * n_pix, 1))
    u = jnp.concatenate(u, axis=-1)
    sq_norm = jnp.sum(u ** 2, axis=-1, keepdims=True)
    scale = sq_norm / (1.0 + sq_norm)
    return scale * u / jnp.sqrt(sq_norm)


if __name__ == "__main__":
    # Small, self-consistent shapes:
    #   PrimaryCaps(num_capsules=8, in_channels=4, out_channels=8,
    #               PrimaryCaps_n_pix=16, kernel_size=3, stride=2, padding=0)
    #   input x: (B=2, C=4, H=9, W=9)  ->  conv out spatial 4x4 = 16 = n_pix
    num_capsules = 8
    in_channels = 4
    out_channels = 8
    kernel_size = 3
    stride = 2
    B, H, W = 2, 9, 9
    n_pix = ((H - kernel_size) // stride + 1) * ((W - kernel_size) // stride + 1)

    key = jax.random.PRNGKey(0)
    kx, kw, kb = jax.random.split(key, 3)
    x = jax.random.normal(kx, (B, in_channels, H, W), dtype=jnp.float32)
    weights = 0.1 * jax.random.normal(
        kw, (num_capsules, out_channels, in_channels, kernel_size, kernel_size),
        dtype=jnp.float32)
    bias = 0.1 * jax.random.normal(kb, (num_capsules, out_channels),
                                   dtype=jnp.float32)

    ref = primary_caps_reference(
        x, weights, bias, stride=stride, out_channels=out_channels, n_pix=n_pix)
    ref = jax.block_until_ready(ref)

    # f32 MXU path (exactness check).
    out_f32 = primary_caps_forward(
        x, weights, bias, kernel_size=kernel_size, stride=stride,
        out_channels=out_channels, n_pix=n_pix, compute_dtype=jnp.float32)
    out_f32 = jax.block_until_ready(out_f32)
    assert out_f32.shape == (B, out_channels * n_pix, num_capsules), out_f32.shape
    err32 = float(jnp.max(jnp.abs(out_f32 - ref)))
    if err32 > 1e-2:
        raise AssertionError(f"f32 path mismatch vs reference, max abs err = {err32}")

    # bf16 MXU path (v6e/v7x fast path; f32 accumulation + f32 squash).
    out_bf16 = primary_caps_forward(
        x, weights, bias, kernel_size=kernel_size, stride=stride,
        out_channels=out_channels, n_pix=n_pix, compute_dtype=jnp.bfloat16)
    out_bf16 = jax.block_until_ready(out_bf16)
    err16 = float(jnp.max(jnp.abs(out_bf16 - ref)))
    if err16 > 5e-2:
        raise AssertionError(f"bf16 path mismatch vs reference, max abs err = {err16}")

    print("KERNEL_OK")
</pallas_src>

<mosaic_0001>
module attributes {stable_mosaic.version = 11 : i64} {
  func.func @primary_caps_kernel(%arg0: i32, %arg1: i32, %arg2: memref<128x128xf32, #tpu.memory_space<vmem>>, %arg3: memref<64x128xf32, #tpu.memory_space<vmem>>, %arg4: memref<64x1xf32, #tpu.memory_space<vmem>>, %arg5: memref<8x8x128xf32, #tpu.memory_space<vmem>>, %arg6: memref<64x128xf32, #tpu.memory_space<vmem>>) attributes {dimension_semantics = [#tpu.dimension_semantics<parallel>, #tpu.dimension_semantics<arbitrary>], iteration_bounds = array<i64: 1, 1>, scalar_prefetch = 0 : i64, scratch_operands = 1 : i64, tpu.core_type = #tpu.core_type<tc>, window_params = [{transform_indices = @transform_0, window_bounds = array<i64: 128, 128>}, {transform_indices = @transform_1, window_bounds = array<i64: 64, 128>}, {pipeline_mode = #tpu.pipeline_mode<synchronous>, transform_indices = @transform_2, window_bounds = array<i64: 64, 1>}, {transform_indices = @transform_3, window_bounds = array<i64: 8, 8, 128>}]} {
    %c0_i32 = arith.constant 0 : i32
    %0 = arith.cmpi eq, %arg1, %c0_i32 : i32
    %1 = arith.extui %0 : i1 to i32
    %c0_i32_0 = arith.constant 0 : i32
    %2 = arith.cmpi ne, %1, %c0_i32_0 : i32
    scf.if %2 {
      %cst_10 = arith.constant 0.000000e+00 : f32
      %12 = vector.broadcast %cst_10 : f32 to vector<64x128xf32>
      %c0_11 = arith.constant 0 : index
      %c0_12 = arith.constant 0 : index
      %13 = vector.load %arg6[%c0_11, %c0_12] : memref<64x128xf32, #tpu.memory_space<vmem>>, vector<64x128xf32>
      tpu.vector_store %arg6[%c0_11, %c0_12], %12 {strides = array<i32>} : memref<64x128xf32, #tpu.memory_space<vmem>>, vector<64x128xf32>,
    } else {
    }
    %c0 = arith.constant 0 : index
    %c0_1 = arith.constant 0 : index
    %3 = vector.load %arg6[%c0, %c0_1] : memref<64x128xf32, #tpu.memory_space<vmem>>, vector<64x128xf32>
    %c0_2 = arith.constant 0 : index
    %c0_3 = arith.constant 0 : index
    %4 = vector.load %arg3[%c0_2, %c0_3] : memref<64x128xf32, #tpu.memory_space<vmem>>, vector<64x128xf32>
    %c0_4 = arith.constant 0 : index
    %c0_5 = arith.constant 0 : index
    %5 = vector.load %arg2[%c0_4, %c0_5] : memref<128x128xf32, #tpu.memory_space<vmem>>, vector<128x128xf32>
    %cst = arith.constant dense<0.000000e+00> : vector<64x128xf32>
    %6 = tpu.matmul %4, %5, %cst {dimension_numbers = #tpu.dot_dimension_numbers<[1], [0], [0], [1], [0, 0, 1, 1], [], []>} : vector<64x128xf32>, vector<128x128xf32>, vector<64x128xf32> -> vector<64x128xf32>
    %7 = arith.addf %3, %6 : vector<64x128xf32>
    %c0_6 = arith.constant 0 : index
    %c0_7 = arith.constant 0 : index
    %8 = vector.load %arg6[%c0_6, %c0_7] : memref<64x128xf32, #tpu.memory_space<vmem>>, vector<64x128xf32>
    tpu.vector_store %arg6[%c0_6, %c0_7], %7 {strides = array<i32>} : memref<64x128xf32, #tpu.memory_space<vmem>>, vector<64x128xf32>,
    %c0_i32_8 = arith.constant 0 : i32
    %9 = arith.cmpi eq, %arg1, %c0_i32_8 : i32
    %10 = arith.extui %9 : i1 to i32
    %c0_i32_9 = arith.constant 0 : i32
    %11 = arith.cmpi ne, %10, %c0_i32_9 : i32
    scf.if %11 {
      %c0_10 = arith.constant 0 : index
      %c0_11 = arith.constant 0 : index
      %12 = vector.load %arg6[%c0_10, %c0_11] : memref<64x128xf32, #tpu.memory_space<vmem>>, vector<64x128xf32>
      %c0_12 = arith.constant 0 : index
      %c0_13 = arith.constant 0 : index
      %13 = vector.load %arg4[%c0_12, %c0_13] : memref<64x1xf32, #tpu.memory_space<vmem>>, vector<64x1xf32>
      %14 = vector.broadcast %13 : vector<64x1xf32> to vector<64x128xf32>
      %15 = arith.addf %12, %14 : vector<64x128xf32>
      %16 = vector.shape_cast %15 : vector<64x128xf32> to vector<8x8x128xf32>
      %17 = arith.mulf %16, %16 : vector<8x8x128xf32>
      %cst_14 = arith.constant dense<0.000000e+00> : vector<8x128xf32>
      %18 = vector.multi_reduction <add>, %17, %cst_14 [0] : vector<8x8x128xf32> to vector<8x128xf32>
      %19 = vector.shape_cast %18 : vector<8x128xf32> to vector<1x8x128xf32>
      %20 = math.sqrt %19 : vector<1x8x128xf32>
      %cst_15 = arith.constant 1.000000e+00 : f32
      %21 = vector.broadcast %cst_15 : f32 to vector<1x8x128xf32>
      %22 = arith.addf %21, %19 : vector<1x8x128xf32>
      %23 = tpu.reciprocal %22 {approx = true} : vector<1x8x128xf32> -> vector<1x8x128xf32>
      %24 = arith.mulf %20, %23 : vector<1x8x128xf32>
      %25 = vector.broadcast %24 : vector<1x8x128xf32> to vector<8x8x128xf32>
      %26 = arith.mulf %16, %25 : vector<8x8x128xf32>
      %c0_16 = arith.constant 0 : index
      %c0_17 = arith.constant 0 : index
      %c0_18 = arith.constant 0 : index
      %27 = vector.load %arg5[%c0_16, %c0_17, %c0_18] : memref<8x8x128xf32, #tpu.memory_space<vmem>>, vector<8x8x128xf32>
      tpu.vector_store %arg5[%c0_16, %c0_17, %c0_18], %26 {strides = array<i32>} : memref<8x8x128xf32, #tpu.memory_space<vmem>>, vector<8x8x128xf32>,
    } else {
    }
    return
  }
  func.func @transform_0(%arg0: i32, %arg1: i32) -> (i32, i32) {
    %c0_i32 = arith.constant 0 : i32
    return %arg1, %arg0 : i32, i32
  }
  func.func @transform_1(%arg0: i32, %arg1: i32) -> (i32, i32) {
    %c0_i32 = arith.constant 0 : i32
    %c0_i32_0 = arith.constant 0 : i32
    return %c0_i32, %arg1 : i32, i32
  }
  func.func @transform_2(%arg0: i32, %arg1: i32) -> (i32, i32) {
    %c0_i32 = arith.constant 0 : i32
    %c0_i32_0 = arith.constant 0 : i32
    %c0_i32_1 = arith.constant 0 : i32
    return %c0_i32, %c0_i32_0 : i32, i32
  }
  func.func @transform_3(%arg0: i32, %arg1: i32) -> (i32, i32, i32) {
    %c0_i32 = arith.constant 0 : i32
    %c0_i32_0 = arith.constant 0 : i32
    %c0_i32_1 = arith.constant 0 : i32
    return %c0_i32, %c0_i32_0, %arg0 : i32, i32, i32
  }
}

</mosaic_0001>

<llo_original>
// kernel: tpu_custom_call.1
$region0: #{tpu_custom_call.1}
  #allocation0 [shape = 'u32[]', space=smem, size = 0x4, offset = 0x4, fixed_abs, tag = 'smem constant byte address 0x4 - core index']
  #allocation1 [shape = 'u32[144,128]{1,0:T(1,128)}', space=vmem, size = 0x12000, scoped, tag = 'internal scratch']
  #allocation2 [shape = 'f32[64,128]{1,0:T(8,128)}', space=vmem, size = 0x8000, scoped, tag = 'scratch operand']
  %s0 = inlined_call_operand.hbm [shape: f32[128,128], index: 0, kind: input, shape index: {}]
  %s1 = inlined_call_operand.vmem [shape: f32[64,128], index: 1, kind: input, shape index: {}]
  %s2 = inlined_call_operand.vmem [shape: f32[64,1], index: 2, kind: input, shape index: {}]
  %s3 = inlined_call_operand.hbm [shape: f32[8,8,128], index: 3, kind: output, shape index: {}]
  %s4 = sld [smem:[#allocation0]]
  $region34: #{tpu_custom_call.1} parent=0
    _
  %s6 = ssub.s32 1, %s4
  %s7 = scalar_select 0, %s6, %s4
  $region1: #{tpu_custom_call.1} parent=0
    #allocation3 [shape = 'u8[65536]{0}', space=vmem, size = 0x10000, scoped, tag = 'input window, operand 0, single buffered']
    #allocation4 [shape = 's32[1]{0}', space=sflag, size = 0x4, scoped, tag = 'scoped memory for tpu_custom_call.1']
    #allocation5 [shape = 's32[1]{0}', space=sflag, size = 0x4, scoped, tag = 'scoped memory for tpu_custom_call.1']
    #allocation6 [shape = 'u8[32768]{0}', space=vmem, size = 0x8000, scoped, tag = 'output window, operand 0, single buffered']
    %8 = vsyncpa [#allocation4], 0
    %9 = vsyncpa [#allocation5], 0
    // Predicated region
    $region2: #{tpu_custom_call.1} parent=1 // pred_check
      _
    $region3: #{tpu_custom_call.1} parent=1 // pred_check_branch
      %11 = sbr.rel (0) target = $region5
    $region4: #{tpu_custom_call.1} parent=1 // pred_region
      %s13 = ssub.s32 2048, 2048
      %14 = vsyncadd [#allocation4], %s13
      %s15 = sshll.u32 [#allocation3], 4
      %s16 = int_to_ptr.vmem [resolvable:$true] %s15
      %21 = dma.hbm_to_vmem [thread:$0]  %s0, 2048, %s16, [#allocation4], 128, 128, 8
    $region5: #{tpu_custom_call.1} parent=1 // pred_fallthru
      _
    // Predicated region
    $region6: #{tpu_custom_call.1} parent=1 // pred_check
      _
    $region7: #{tpu_custom_call.1} parent=1 // pred_check_branch
      %23 = sbr.rel (0) target = $region9
    $region8: #{tpu_custom_call.1} parent=1 // pred_region
      _
    $region9: #{tpu_custom_call.1} parent=1 // pred_fallthru
      _
    // Predicated region
    $region10: #{tpu_custom_call.1} parent=1 // pred_check
      _
    $region11: #{tpu_custom_call.1} parent=1 // pred_check_branch
      %25 = sbr.rel (0) target = $region13
    $region12: #{tpu_custom_call.1} parent=1 // pred_region
      _
    $region13: #{tpu_custom_call.1} parent=1 // pred_fallthru
      _
    // Predicated region
    $region14: #{tpu_custom_call.1} parent=1 // pred_check
      _
    $region15: #{tpu_custom_call.1} parent=1 // pred_check_branch
      %27 = sbr.rel (0) target = $region17
    $region16: #{tpu_custom_call.1} parent=1 // pred_region
      %28 = dma.done [#allocation4], 2048
    $region17: #{tpu_custom_call.1} parent=1 // pred_fallthru
      _
    %p29 = scmp.eq.s32.totalorder 0, 0
    // Predicated region
    $region18: #{tpu_custom_call.1} parent=1 // pred_check
      %p30 = pneg %p29
    $region19: #{tpu_custom_call.1} parent=1 // pred_check_branch
      %32 = sbr.rel (%p30) target = $region21
    $region20: #{tpu_custom_call.1} parent=1 // pred_region
      %33 = vst [vmem:[#allocation2] sm:$0xff] 0.0
      %34 = vst [vmem:[#allocation2 + $0x8] sm:$0xff] 0.0
      %35 = vst [vmem:[#allocation2 + $0x10] sm:$0xff] 0.0
      %36 = vst [vmem:[#allocation2 + $0x18] sm:$0xff] 0.0
      %37 = vst [vmem:[#allocation2 + $0x20] sm:$0xff] 0.0
      %38 = vst [vmem:[#allocation2 + $0x28] sm:$0xff] 0.0
      %39 = vst [vmem:[#allocation2 + $0x30] sm:$0xff] 0.0
      %40 = vst [vmem:[#allocation2 + $0x38] sm:$0xff] 0.0
    $region21: #{tpu_custom_call.1} parent=1 // pred_fallthru
      _
    %v41 = vld [vmem:[#allocation2] sm:$0xff]
    %v42 = vld [vmem:[#allocation2 + $0x8] sm:$0xff]
    %v43 = vld [vmem:[#allocation2 + $0x10] sm:$0xff]
    %v44 = vld [vmem:[#allocation2 + $0x18] sm:$0xff]
    %v45 = vld [vmem:[#allocation2 + $0x20] sm:$0xff]
    %v46 = vld [vmem:[#allocation2 + $0x28] sm:$0xff]
    %v47 = vld [vmem:[#allocation2 + $0x30] sm:$0xff]
    %v48 = vld [vmem:[#allocation2 + $0x38] sm:$0xff]
    %v49 = vld [vmem:[%s1] sm:$0xff]
    %v50 = vld [vmem:[%s1 + $0x8] sm:$0xff]
    %v51 = vld [vmem:[%s1 + $0x10] sm:$0xff]
    %v52 = vld [vmem:[%s1 + $0x18] sm:$0xff]
    %v53 = vld [vmem:[%s1 + $0x20] sm:$0xff]
    %v54 = vld [vmem:[%s1 + $0x28] sm:$0xff]
    %v55 = vld [vmem:[%s1 + $0x30] sm:$0xff]
    %v56 = vld [vmem:[%s1 + $0x38] sm:$0xff]
    %v57 = vld [vmem:[#allocation3] sm:$0xff]
    %v58 = vld [vmem:[#allocation3 + $0x8] sm:$0xff]
    %v59 = vld [vmem:[#allocation3 + $0x10] sm:$0xff]
    %v60 = vld [vmem:[#allocation3 + $0x18] sm:$0xff]
    %v61 = vld [vmem:[#allocation3 + $0x20] sm:$0xff]
    %v62 = vld [vmem:[#allocation3 + $0x28] sm:$0xff]
    %v63 = vld [vmem:[#allocation3 + $0x30] sm:$0xff]
    %v64 = vld [vmem:[#allocation3 + $0x38] sm:$0xff]
    %v65 = vld [vmem:[#allocation3 + $0x40] sm:$0xff]
    %v66 = vld [vmem:[#allocation3 + $0x48] sm:$0xff]
    %v67 = vld [vmem:[#allocation3 + $0x50] sm:$0xff]
    %v68 = vld [vmem:[#allocation3 + $0x58] sm:$0xff]
    %v69 = vld [vmem:[#allocation3 + $0x60] sm:$0xff]
    %v70 = vld [vmem:[#allocation3 + $0x68] sm:$0xff]
    %v71 = vld [vmem:[#allocation3 + $0x70] sm:$0xff]
    %v72 = vld [vmem:[#allocation3 + $0x78] sm:$0xff]
    %73 = vmatprep.subr.mxu0 0.0
    %74 = vmatpush1.msra.mxu0 %v57
    %75 = vmatprep.subr.mxu0 0.0
    %76 = vmatpush1.msra.mxu0 %v58
    %77 = vmatprep.subr.mxu0 0.0
    %78 = vmatpush1.msra.mxu0 %v59
    %79 = vmatprep.subr.mxu0 0.0
    %80 = vmatpush1.msra.mxu0 %v60
    %81 = vmatprep.subr.mxu0 0.0
    %82 = vmatpush1.msra.mxu0 %v61
    %83 = vmatprep.subr.mxu0 0.0
    %84 = vmatpush1.msra.mxu0 %v62
    %85 = vmatprep.subr.mxu0 0.0
    %86 = vmatpush1.msra.mxu0 %v63
    %87 = vmatprep.subr.mxu0 0.0
    %88 = vmatpush1.msra.mxu0 %v64
    %89 = vmatprep.subr.mxu0 0.0
    %90 = vmatpush1.msra.mxu0 %v65
    %91 = vmatprep.subr.mxu0 0.0
    %92 = vmatpush1.msra.mxu0 %v66
    %93 = vmatprep.subr.mxu0 0.0
    %94 = vmatpush1.msra.mxu0 %v67
    %95 = vmatprep.subr.mxu0 0.0
    %96 = vmatpush1.msra.mxu0 %v68
    %97 = vmatprep.subr.mxu0 0.0
    %98 = vmatpush1.msra.mxu0 %v69
    %99 = vmatprep.subr.mxu0 0.0
    %100 = vmatpush1.msra.mxu0 %v70
    %101 = vmatprep.subr.mxu0 0.0
    %102 = vmatpush1.msra.mxu0 %v71
    %103 = vmatprep.subr.mxu0 0.0
    %104 = vmatpush1.msra.mxu0 %v72
    %105 = vmatprep.subr.mxu0 0.0
    %106 = vmatpush1.msra.mxu0 0.0
    %107 = vmatprep.subr.mxu0 0.0
    %108 = vmatpush1.msra.mxu0 0.0
    %109 = vmatprep.subr.mxu0 0.0
    %110 = vmatpush1.msra.mxu0 0.0
    %111 = vmatprep.subr.mxu0 0.0
    %112 = vmatpush1.msra.mxu0 0.0
    %113 = vmatprep.subr.mxu0 0.0
    %114 = vmatpush1.msra.mxu0 0.0
    %115 = vmatprep.subr.mxu0 0.0
    %116 = vmatpush1.msra.mxu0 0.0
    %117 = vmatprep.subr.mxu0 0.0
    %118 = vmatpush1.msra.mxu0 0.0
    %119 = vmatprep.subr.mxu0 0.0
    %120 = vmatpush1.msra.mxu0 0.0
    %121 = vmatprep.subr.mxu0 0.0
    %122 = vmatpush1.msra.mxu0 0.0
    %123 = vmatprep.subr.mxu0 0.0
    %124 = vmatpush1.msra.mxu0 0.0
    %125 = vmatprep.subr.mxu0 0.0
    %126 = vmatpush1.msra.mxu0 0.0
    %127 = vmatprep.subr.mxu0 0.0
    %128 = vmatpush1.msra.mxu0 0.0
    %129 = vmatprep.subr.mxu0 0.0
    %130 = vmatpush1.msra.mxu0 0.0
    %131 = vmatprep.subr.mxu0 0.0
    %132 = vmatpush1.msra.mxu0 0.0
    %133 = vmatprep.subr.mxu0 0.0
    %134 = vmatpush1.msra.mxu0 0.0
    %135 = vmatprep.subr.mxu0 0.0
    %136 = vmatpush1.msra.mxu0 0.0
    %137 = vmatprep.mubr.f32.mxu0 0.0
    %138 = vmatmul.mubr.f32.gmra.mrb[0].mxu0 %v49
    %v139 = vpop.f32.mrb[0].mxu0
    %v140 = vadd.f32 0.0, %v139
    %v141 = vpop.f32.mrb[0].mxu0
    %142 = vmatprep.mubr.f32.mxu0 0.0
    %143 = vmatmul.mubr.f32.gmra.mrb[0].mxu0 %v50
    %v144 = vpop.f32.mrb[0].mxu0
    %v145 = vadd.f32 0.0, %v144
    %v146 = vpop.f32.mrb[0].mxu0
    %147 = vmatprep.mubr.f32.mxu0 0.0
    %148 = vmatmul.mubr.f32.gmra.mrb[0].mxu0 %v51
    %v149 = vpop.f32.mrb[0].mxu0
    %v150 = vadd.f32 0.0, %v149
    %v151 = vpop.f32.mrb[0].mxu0
    %152 = vmatprep.mubr.f32.mxu0 0.0
    %153 = vmatmul.mubr.f32.gmra.mrb[0].mxu0 %v52
    %v154 = vpop.f32.mrb[0].mxu0
    %v155 = vadd.f32 0.0, %v154
    %v156 = vpop.f32.mrb[0].mxu0
    %157 = vmatprep.mubr.f32.mxu0 0.0
    %158 = vmatmul.mubr.f32.gmra.mrb[0].mxu0 %v53
    %v159 = vpop.f32.mrb[0].mxu0
    %v160 = vadd.f32 0.0, %v159
    %v161 = vpop.f32.mrb[0].mxu0
    %162 = vmatprep.mubr.f32.mxu0 0.0
    %163 = vmatmul.mubr.f32.gmra.mrb[0].mxu0 %v54
    %v164 = vpop.f32.mrb[0].mxu0
    %v165 = vadd.f32 0.0, %v164
    %v166 = vpop.f32.mrb[0].mxu0
    %167 = vmatprep.mubr.f32.mxu0 0.0
    %168 = vmatmul.mubr.f32.gmra.mrb[0].mxu0 %v55
    %v169 = vpop.f32.mrb[0].mxu0
    %v170 = vadd.f32 0.0, %v169
    %v171 = vpop.f32.mrb[0].mxu0
    %172 = vmatprep.mubr.f32.mxu0 0.0
    %173 = vmatmul.mubr.f32.gmra.mrb[0].mxu0 %v56
    %v174 = vpop.f32.mrb[0].mxu0
    %v175 = vadd.f32 0.0, %v174
    %v176 = vpop.f32.mrb[0].mxu0
    %177 = vdwg.mxu0
    %v178 = vadd.f32 %v41, %v140
    %v179 = vadd.f32 %v42, %v145
    %v180 = vadd.f32 %v43, %v150
    %v181 = vadd.f32 %v44, %v155
    %v182 = vadd.f32 %v45, %v160
    %v183 = vadd.f32 %v46, %v165
    %v184 = vadd.f32 %v47, %v170
    %v185 = vadd.f32 %v48, %v175
    %186 = vst [vmem:[#allocation2] sm:$0xff] %v178
    %187 = vst [vmem:[#allocation2 + $0x8] sm:$0xff] %v179
    %188 = vst [vmem:[#allocation2 + $0x10] sm:$0xff] %v180
    %189 = vst [vmem:[#allocation2 + $0x18] sm:$0xff] %v181
    %190 = vst [vmem:[#allocation2 + $0x20] sm:$0xff] %v182
    %191 = vst [vmem:[#allocation2 + $0x28] sm:$0xff] %v183
    %192 = vst [vmem:[#allocation2 + $0x30] sm:$0xff] %v184
    %193 = vst [vmem:[#allocation2 + $0x38] sm:$0xff] %v185
    // Predicated region
    $region22: #{tpu_custom_call.1} parent=1 // pred_check
      %p194 = pneg %p29
    $region23: #{tpu_custom_call.1} parent=1 // pred_check_branch
      %196 = sbr.rel (%p194) target = $region25
    $region24: #{tpu_custom_call.1} parent=1 // pred_region
      %v197 = vld [vmem:[#allocation2] sm:$0xff]
      %v198 = vld [vmem:[#allocation2 + $0x8] sm:$0xff]
      %v199 = vld [vmem:[#allocation2 + $0x10] sm:$0xff]
      %v200 = vld [vmem:[#allocation2 + $0x18] sm:$0xff]
      %v201 = vld [vmem:[#allocation2 + $0x20] sm:$0xff]
      %v202 = vld [vmem:[#allocation2 + $0x28] sm:$0xff]
      %v203 = vld [vmem:[#allocation2 + $0x30] sm:$0xff]
      %v204 = vld [vmem:[#allocation2 + $0x38] sm:$0xff]
      %v205 = vld [vmem:[%s2] sm:$0xff]
      %v206 = vld [vmem:[%s2 + $0x8] sm:$0xff]
      %v207 = vld [vmem:[%s2 + $0x10] sm:$0xff]
      %v208 = vld [vmem:[%s2 + $0x18] sm:$0xff]
      %v209 = vld [vmem:[%s2 + $0x20] sm:$0xff]
      %v210 = vld [vmem:[%s2 + $0x28] sm:$0xff]
      %v211 = vld [vmem:[%s2 + $0x30] sm:$0xff]
      %v212 = vld [vmem:[%s2 + $0x38] sm:$0xff]
      %214 = vset.pattern.permute.xlu0 0
      %215 = vperm.xlu0 %214, %v205
      %v216 = vpop.permute.xlu0 %215
      %219 = vset.pattern.permute.xlu0 0
      %220 = vperm.xlu0 %219, %v206
      %v221 = vpop.permute.xlu0 %220
      %224 = vset.pattern.permute.xlu0 0
      %225 = vperm.xlu0 %224, %v207
      %v226 = vpop.permute.xlu0 %225
      %229 = vset.pattern.permute.xlu0 0
      %230 = vperm.xlu0 %229, %v208
      %v231 = vpop.permute.xlu0 %230
      %234 = vset.pattern.permute.xlu0 0
      %235 = vperm.xlu0 %234, %v209
      %v236 = vpop.permute.xlu0 %235
      %239 = vset.pattern.permute.xlu0 0
      %240 = vperm.xlu0 %239, %v210
      %v241 = vpop.permute.xlu0 %240
      %244 = vset.pattern.permute.xlu0 0
      %245 = vperm.xlu0 %244, %v211
      %v246 = vpop.permute.xlu0 %245
      %249 = vset.pattern.permute.xlu0 0
      %250 = vperm.xlu0 %249, %v212
      %v251 = vpop.permute.xlu0 %250
      %v253 = vadd.f32 %v197, %v216
      %v254 = vadd.f32 %v198, %v221
      %v255 = vadd.f32 %v199, %v226
      %v256 = vadd.f32 %v200, %v231
      %v257 = vadd.f32 %v201, %v236
      %v258 = vadd.f32 %v202, %v241
      %v259 = vadd.f32 %v203, %v246
      %v260 = vadd.f32 %v204, %v251
      %v261 = vmul.f32 %v253, %v253
      %v262 = vmul.f32 %v254, %v254
      %v263 = vmul.f32 %v255, %v255
      %v264 = vmul.f32 %v256, %v256
      %v265 = vmul.f32 %v257, %v257
      %v266 = vmul.f32 %v258, %v258
      %v267 = vmul.f32 %v259, %v259
      %v268 = vmul.f32 %v260, %v260
      %v269 = vadd.f32 %v261, %v262
      %v270 = vadd.f32 %v269, %v263
      %v271 = vadd.f32 %v270, %v264
      %v272 = vadd.f32 %v271, %v265
      %v273 = vadd.f32 %v272, %v266
      %v274 = vadd.f32 %v273, %v267
      %v275 = vadd.f32 %v274, %v268
      %v276 = vrsqrt.pop %v275
      %v277 = vmul.f32 %v275, %v276
      %vm278 = vcmp.eq.f32.partialorder %v275, inf
      %v279 = vsel %vm278, %v275, %v277
      %vm280 = vcmp.eq.f32.partialorder %v275, 0.0
      %v281 = vand.u32 %v275, 2147483648
      %v282 = vsel %vm280, %v281, %v279
      %v283 = vadd.f32 %v275, 1.0
      %v284 = vrcp.pop %v283
      %v285 = vmul.f32 %v282, %v284
      %v286 = vmul.f32 %v253, %v285
      %v287 = vmul.f32 %v254, %v285
      %v288 = vmul.f32 %v255, %v285
      %v289 = vmul.f32 %v256, %v285
      %v290 = vmul.f32 %v257, %v285
      %v291 = vmul.f32 %v258, %v285
      %v292 = vmul.f32 %v259, %v285
      %v293 = vmul.f32 %v260, %v285
      %294 = vst [vmem:[#allocation6] sm:$0xff] %v286
      %295 = vst [vmem:[#allocation6 + $0x8] sm:$0xff] %v287
      %296 = vst [vmem:[#allocation6 + $0x10] sm:$0xff] %v288
      %297 = vst [vmem:[#allocation6 + $0x18] sm:$0xff] %v289
      %298 = vst [vmem:[#allocation6 + $0x20] sm:$0xff] %v290
      %299 = vst [vmem:[#allocation6 + $0x28] sm:$0xff] %v291
      %300 = vst [vmem:[#allocation6 + $0x30] sm:$0xff] %v292
      %301 = vst [vmem:[#allocation6 + $0x38] sm:$0xff] %v293
    $region25: #{tpu_custom_call.1} parent=1 // pred_fallthru
      _
    // Predicated region
    $region26: #{tpu_custom_call.1} parent=1 // pred_check
      _
    $region27: #{tpu_custom_call.1} parent=1 // pred_check_branch
      %303 = sbr.rel (0) target = $region29
    $region28: #{tpu_custom_call.1} parent=1 // pred_region
      %s305 = ssub.s32 1024, 1024
      %306 = vsyncadd [#allocation5], %s305
      %s307 = sshll.u32 [#allocation6], 4
      %s308 = int_to_ptr.vmem [resolvable:$true] %s307
      %313 = dma.vmem_to_hbm [thread:$0]  %s308, 1024, %s3, [#allocation5], 128, 128, 8
    $region29: #{tpu_custom_call.1} parent=1 // pred_fallthru
      _
    // Predicated region
    $region30: #{tpu_custom_call.1} parent=1 // pred_check
      _
    $region31: #{tpu_custom_call.1} parent=1 // pred_check_branch
      %315 = sbr.rel (0) target = $region33
    $region32: #{tpu_custom_call.1} parent=1 // pred_region
      %316 = dma.done [#allocation5], 1024
    $region33: #{tpu_custom_call.1} parent=1 // pred_fallthru
      _
    %317 = vsyncpa [#allocation4], 1
    %318 = vsyncpa [#allocation5], 1

</llo_original>
